<compile_context>
chip_gen: v7x
topology: tpu7x:2x2x1
jax: 0.10.0
libtpu: 0.0.40
codegen_flags: <defaults>
</compile_context>

<pallas_src>
import functools

import jax
import jax.numpy as jnp
from jax.experimental import pallas as pl
from jax.experimental.pallas import tpu as pltpu


def _mha_kernel(x_ref, wqkv_ref, wout_ref, bias_ref, o_ref,
                *, seq, num_heads, head_dim, scale):
    E = num_heads * head_dim

    # Fused QKV projection for ALL heads of this batch: one MXU push
    # (M=S, K=E, N=3E).  bf16 operands, f32 accumulate, f32 bias add.
    qkv = jnp.dot(x_ref[...], wqkv_ref[...],
                  preferred_element_type=jnp.float32) + bias_ref[0:1, :]
    qkv_bf = qkv.astype(jnp.bfloat16)        # single cast for all heads' q/k/v

    # out_fc bias folded into the accumulator init (no trailing add, no concat).
    out = jnp.broadcast_to(bias_ref[1:2, 0:E], (seq, E))

    # Per-head attention + per-head out_fc accumulation.  Shapes are tiny and
    # static, so a fully unrolled loop beats any in-kernel loop overhead.
    for h in range(num_heads):
        c0 = h * head_dim
        qh = qkv_bf[:, c0:c0 + head_dim]                      # (S, hd) bf16
        kh = qkv_bf[:, E + c0:E + c0 + head_dim]
        vh = qkv_bf[:, 2 * E + c0:2 * E + c0 + head_dim]

        # q . k^T contracted over head_dim (no explicit transpose).
        s = jax.lax.dot_general(
            qh, kh, (((1,), (1,)), ((), ())),
            preferred_element_type=jnp.float32) * scale       # (S, S) f32

        # Numerically stable softmax, all elementwise math in f32.
        s = s - jnp.max(s, axis=-1, keepdims=True)
        p = jnp.exp(s)
        w = p * pl.reciprocal(jnp.sum(p, axis=-1, keepdims=True), approx=True)

        pv = jnp.dot(w.astype(jnp.bfloat16), vh,
                     preferred_element_type=jnp.float32)      # (S, hd) f32

        # Fused out_fc, accumulated per head via a sublane-aligned row slice
        # of W_out (c0 is a multiple of 8) -> no lane-axis concatenation.
        out = out + jnp.dot(pv.astype(jnp.bfloat16),
                            wout_ref[c0:c0 + head_dim, :],
                            preferred_element_type=jnp.float32)

    o_ref[...] = out.astype(o_ref.dtype)


def pack_mha_params(wq, bq, wk, bk, wv, bv, wo, bo):
    """One-time host-side packing of the torch-style MHA parameters.

    wq/wk/wv: (num_heads, head_dim, E) per-head Linear weights (out, in).
    bq/bk/bv: (num_heads, head_dim) per-head biases.
    wo: (E, E) out_fc weight (out, in);  bo: (E,) out_fc bias.
    """
    num_heads, head_dim, E = wq.shape
    assert num_heads * head_dim == E

    def stack(w):  # (H, hd, E) -> (E, H*hd) with W[e, h*hd + d] = w[h, d, e]
        return jnp.transpose(w, (2, 0, 1)).reshape(E, num_heads * head_dim)

    # Fused (E, 3E) QKV weight: cols [0,E)->q (head-major), [E,2E)->k, [2E,3E)->v.
    w_qkv = jnp.concatenate([stack(wq), stack(wk), stack(wv)],
                            axis=1).astype(jnp.bfloat16)          # (E, 3E) bf16
    w_out = wo.T.astype(jnp.bfloat16)                             # (E, E)  bf16

    # Merged f32 bias table: row 0 = qkv bias, row 1 = out_fc bias (zero-padded).
    b_qkv = jnp.concatenate([bq.reshape(-1), bk.reshape(-1), bv.reshape(-1)])
    b_out = jnp.concatenate([bo, jnp.zeros((2 * E,), bo.dtype)])
    biases = jnp.stack([b_qkv, b_out], axis=0).astype(jnp.float32)  # (2, 3E)

    return dict(w_qkv=w_qkv, w_out=w_out, biases=biases,
                num_heads=num_heads, head_dim=head_dim)


def multi_head_attention_pallas(x, params):
    """x: (B, S, E) f32.  params: output of pack_mha_params (reused per call)."""
    B, S, E = x.shape
    num_heads, head_dim = params["num_heads"], params["head_dim"]
    assert num_heads * head_dim == E
    scale = 1.0 / float(head_dim) ** 0.5

    # Flatten batch and cast activations to the MXU operand dtype once.
    x2 = x.reshape(B * S, E).astype(jnp.bfloat16)

    kernel = functools.partial(_mha_kernel, seq=S, num_heads=num_heads,
                               head_dim=head_dim, scale=scale)

    out2 = pl.pallas_call(
        kernel,
        out_shape=jax.ShapeDtypeStruct((B * S, E), x.dtype),
        grid_spec=pltpu.PrefetchScalarGridSpec(
            num_scalar_prefetch=0,
            grid=(B,),  # one batch per step; splits across v7x's 2 TCs
            in_specs=[
                pl.BlockSpec((S, E), lambda b: (b, 0)),          # x (this batch)
                pl.BlockSpec((E, 3 * E), lambda b: (0, 0)),      # fused W_qkv (resident)
                pl.BlockSpec((E, E), lambda b: (0, 0)),          # W_out (resident)
                pl.BlockSpec((2, 3 * E), lambda b: (0, 0)),      # merged biases (resident)
            ],
            out_specs=pl.BlockSpec((S, E), lambda b: (b, 0)),
        ),
        compiler_params=pltpu.CompilerParams(
            dimension_semantics=("parallel",)),
    )(x2, params["w_qkv"], params["w_out"], params["biases"])

    return out2.reshape(B, S, E)


def multi_head_attention_ref(x, wq, bq, wk, bk, wv, bv, wo, bo):
    """Pure-JAX reference mirroring the PyTorch forward (f32 throughout)."""
    num_heads = wq.shape[0]
    heads = []
    for h in range(num_heads):
        q = jnp.einsum("bse,de->bsd", x, wq[h]) + bq[h]
        k = jnp.einsum("bse,de->bsd", x, wk[h]) + bk[h]
        v = jnp.einsum("bse,de->bsd", x, wv[h]) + bv[h]
        d_k = q.shape[-1]
        scores = jnp.einsum("bqd,bkd->bqk", q, k) / (d_k ** 0.5)
        w = jax.nn.softmax(scores, axis=-1)
        heads.append(jnp.einsum("bqk,bkd->bqd", w, v))
    cat = jnp.concatenate(heads, axis=-1)
    return jnp.einsum("bse,oe->bso", cat, wo) + bo


if __name__ == "__main__":
    # Small shapes consistent with the module: batch=2, seq=8, embed_dim=32,
    # num_heads=4 -> head_dim=8.
    B, S, E, NH = 2, 8, 32, 4
    HD = E // NH

    key = jax.random.PRNGKey(0)
    ks = jax.random.split(key, 9)

    x = jax.random.normal(ks[0], (B, S, E), dtype=jnp.float32)
    wq = jax.random.normal(ks[1], (NH, HD, E), dtype=jnp.float32) * 0.1
    bq = jax.random.normal(ks[2], (NH, HD), dtype=jnp.float32) * 0.1
    wk = jax.random.normal(ks[3], (NH, HD, E), dtype=jnp.float32) * 0.1
    bk = jax.random.normal(ks[4], (NH, HD), dtype=jnp.float32) * 0.1
    wv = jax.random.normal(ks[5], (NH, HD, E), dtype=jnp.float32) * 0.1
    bv = jax.random.normal(ks[6], (NH, HD), dtype=jnp.float32) * 0.1
    wo = jax.random.normal(ks[7], (E, E), dtype=jnp.float32) * 0.1
    bo = jax.random.normal(ks[8], (E,), dtype=jnp.float32) * 0.1

    # Pack / cast weights ONCE (hoisted out of the per-forward path).
    params = pack_mha_params(wq, bq, wk, bk, wv, bv, wo, bo)
    params = jax.tree_util.tree_map(
        lambda a: jax.block_until_ready(a) if isinstance(a, jax.Array) else a,
        params)

    out = multi_head_attention_pallas(x, params)
    out = jax.block_until_ready(out)

    ref = multi_head_attention_ref(x, wq, bq, wk, bk, wv, bv, wo, bo)
    assert out.shape == (B, S, E), out.shape
    # bf16 MXU operands (f32 accumulate) + approx reciprocal -> loose tolerance.
    err = float(jnp.max(jnp.abs(out - ref)))
    assert jnp.allclose(out, ref, atol=3e-2, rtol=3e-2), f"mismatch, max err {err}"

    print("KERNEL_OK")
</pallas_src>

<mosaic_0001>
module attributes {stable_mosaic.version = 11 : i64} {
  func.func @_mha_kernel(%arg0: i32, %arg1: memref<8x32xbf16, #tpu.memory_space<vmem>>, %arg2: memref<32x96xbf16, #tpu.memory_space<vmem>>, %arg3: memref<32x32xbf16, #tpu.memory_space<vmem>>, %arg4: memref<2x96xf32, #tpu.memory_space<vmem>>, %arg5: memref<8x32xf32, #tpu.memory_space<vmem>>) attributes {dimension_semantics = [#tpu.dimension_semantics<parallel>], iteration_bounds = array<i64: 2>, scalar_prefetch = 0 : i64, scratch_operands = 0 : i64, tpu.core_type = #tpu.core_type<tc>, window_params = [{transform_indices = @transform_0, window_bounds = array<i64: 8, 32>}, {pipeline_mode = #tpu.pipeline_mode<synchronous>, transform_indices = @transform_1, window_bounds = array<i64: 32, 96>}, {pipeline_mode = #tpu.pipeline_mode<synchronous>, transform_indices = @transform_2, window_bounds = array<i64: 32, 32>}, {pipeline_mode = #tpu.pipeline_mode<synchronous>, transform_indices = @transform_3, window_bounds = array<i64: 2, 96>}, {transform_indices = @transform_4, window_bounds = array<i64: 8, 32>}]} {
    %c0 = arith.constant 0 : index
    %c0_0 = arith.constant 0 : index
    %0 = vector.load %arg1[%c0, %c0_0] : memref<8x32xbf16, #tpu.memory_space<vmem>>, vector<8x32xbf16>
    %c0_1 = arith.constant 0 : index
    %c0_2 = arith.constant 0 : index
    %1 = vector.load %arg2[%c0_1, %c0_2] : memref<32x96xbf16, #tpu.memory_space<vmem>>, vector<32x96xbf16>
    %cst = arith.constant dense<0.000000e+00> : vector<8x96xf32>
    %2 = tpu.matmul %0, %1, %cst {dimension_numbers = #tpu.dot_dimension_numbers<[1], [0], [0], [1], [0, 0, 1, 1], [], []>} : vector<8x32xbf16>, vector<32x96xbf16>, vector<8x96xf32> -> vector<8x96xf32>
    %c0_3 = arith.constant 0 : index
    %c0_4 = arith.constant 0 : index
    %3 = vector.load %arg4[%c0_3, %c0_4] : memref<2x96xf32, #tpu.memory_space<vmem>>, vector<1x96xf32>
    %4 = vector.broadcast %3 : vector<1x96xf32> to vector<8x96xf32>
    %5 = arith.addf %2, %4 : vector<8x96xf32>
    %6 = arith.truncf %5 : vector<8x96xf32> to vector<8x96xbf16>
    %c1 = arith.constant 1 : index
    %c0_5 = arith.constant 0 : index
    %7 = vector.load %arg4[%c1, %c0_5] : memref<2x96xf32, #tpu.memory_space<vmem>>, vector<1x32xf32>
    %8 = vector.shape_cast %7 : vector<1x32xf32> to vector<1x32xf32>
    %9 = vector.broadcast %8 : vector<1x32xf32> to vector<8x32xf32>
    %10 = vector.extract_strided_slice %6 {offsets = [0, 0], sizes = [8, 8], strides = [1, 1]} : vector<8x96xbf16> to vector<8x8xbf16>
    %11 = vector.extract_strided_slice %6 {offsets = [0, 32], sizes = [8, 8], strides = [1, 1]} : vector<8x96xbf16> to vector<8x8xbf16>
    %12 = vector.extract_strided_slice %6 {offsets = [0, 64], sizes = [8, 8], strides = [1, 1]} : vector<8x96xbf16> to vector<8x8xbf16>
    %cst_6 = arith.constant dense<0.000000e+00> : vector<8x8xf32>
    %13 = tpu.matmul %10, %11, %cst_6 {dimension_numbers = #tpu.dot_dimension_numbers<[1], [1], [0], [0], [0, 0, 1, 0], [], []>} : vector<8x8xbf16>, vector<8x8xbf16>, vector<8x8xf32> -> vector<8x8xf32>
    %cst_7 = arith.constant 0.353553385 : f32
    %14 = vector.broadcast %cst_7 : f32 to vector<8x8xf32>
    %15 = arith.mulf %13, %14 : vector<8x8xf32>
    %cst_8 = arith.constant dense<0xFF800000> : vector<8xf32>
    %16 = vector.multi_reduction <maximumf>, %15, %cst_8 [1] : vector<8x8xf32> to vector<8xf32>
    %17 = vector.shape_cast %16 : vector<8xf32> to vector<8x1xf32>
    %18 = vector.broadcast %17 : vector<8x1xf32> to vector<8x8xf32>
    %19 = arith.subf %15, %18 : vector<8x8xf32>
    %20 = math.exp %19 : vector<8x8xf32>
    %cst_9 = arith.constant dense<0.000000e+00> : vector<8xf32>
    %21 = vector.multi_reduction <add>, %20, %cst_9 [1] : vector<8x8xf32> to vector<8xf32>
    %22 = vector.shape_cast %21 : vector<8xf32> to vector<8x1xf32>
    %23 = tpu.reciprocal %22 {approx = true} : vector<8x1xf32> -> vector<8x1xf32>
    %24 = vector.broadcast %23 : vector<8x1xf32> to vector<8x8xf32>
    %25 = arith.mulf %20, %24 : vector<8x8xf32>
    %26 = arith.truncf %25 : vector<8x8xf32> to vector<8x8xbf16>
    %cst_10 = arith.constant dense<0.000000e+00> : vector<8x8xf32>
    %27 = tpu.matmul %26, %12, %cst_10 {dimension_numbers = #tpu.dot_dimension_numbers<[1], [0], [0], [1], [0, 0, 1, 1], [], []>} : vector<8x8xbf16>, vector<8x8xbf16>, vector<8x8xf32> -> vector<8x8xf32>
    %28 = arith.truncf %27 : vector<8x8xf32> to vector<8x8xbf16>
    %c0_11 = arith.constant 0 : index
    %c0_12 = arith.constant 0 : index
    %29 = vector.load %arg3[%c0_11, %c0_12] : memref<32x32xbf16, #tpu.memory_space<vmem>>, vector<8x32xbf16>
    %cst_13 = arith.constant dense<0.000000e+00> : vector<8x32xf32>
    %30 = tpu.matmul %28, %29, %cst_13 {dimension_numbers = #tpu.dot_dimension_numbers<[1], [0], [0], [1], [0, 0, 1, 1], [], []>} : vector<8x8xbf16>, vector<8x32xbf16>, vector<8x32xf32> -> vector<8x32xf32>
    %31 = arith.addf %9, %30 : vector<8x32xf32>
    %32 = vector.extract_strided_slice %6 {offsets = [0, 8], sizes = [8, 8], strides = [1, 1]} : vector<8x96xbf16> to vector<8x8xbf16>
    %33 = vector.extract_strided_slice %6 {offsets = [0, 40], sizes = [8, 8], strides = [1, 1]} : vector<8x96xbf16> to vector<8x8xbf16>
    %34 = vector.extract_strided_slice %6 {offsets = [0, 72], sizes = [8, 8], strides = [1, 1]} : vector<8x96xbf16> to vector<8x8xbf16>
    %cst_14 = arith.constant dense<0.000000e+00> : vector<8x8xf32>
    %35 = tpu.matmul %32, %33, %cst_14 {dimension_numbers = #tpu.dot_dimension_numbers<[1], [1], [0], [0], [0, 0, 1, 0], [], []>} : vector<8x8xbf16>, vector<8x8xbf16>, vector<8x8xf32> -> vector<8x8xf32>
    %cst_15 = arith.constant 0.353553385 : f32
    %36 = vector.broadcast %cst_15 : f32 to vector<8x8xf32>
    %37 = arith.mulf %35, %36 : vector<8x8xf32>
    %cst_16 = arith.constant dense<0xFF800000> : vector<8xf32>
    %38 = vector.multi_reduction <maximumf>, %37, %cst_16 [1] : vector<8x8xf32> to vector<8xf32>
    %39 = vector.shape_cast %38 : vector<8xf32> to vector<8x1xf32>
    %40 = vector.broadcast %39 : vector<8x1xf32> to vector<8x8xf32>
    %41 = arith.subf %37, %40 : vector<8x8xf32>
    %42 = math.exp %41 : vector<8x8xf32>
    %cst_17 = arith.constant dense<0.000000e+00> : vector<8xf32>
    %43 = vector.multi_reduction <add>, %42, %cst_17 [1] : vector<8x8xf32> to vector<8xf32>
    %44 = vector.shape_cast %43 : vector<8xf32> to vector<8x1xf32>
    %45 = tpu.reciprocal %44 {approx = true} : vector<8x1xf32> -> vector<8x1xf32>
    %46 = vector.broadcast %45 : vector<8x1xf32> to vector<8x8xf32>
    %47 = arith.mulf %42, %46 : vector<8x8xf32>
    %48 = arith.truncf %47 : vector<8x8xf32> to vector<8x8xbf16>
    %cst_18 = arith.constant dense<0.000000e+00> : vector<8x8xf32>
    %49 = tpu.matmul %48, %34, %cst_18 {dimension_numbers = #tpu.dot_dimension_numbers<[1], [0], [0], [1], [0, 0, 1, 1], [], []>} : vector<8x8xbf16>, vector<8x8xbf16>, vector<8x8xf32> -> vector<8x8xf32>
    %50 = arith.truncf %49 : vector<8x8xf32> to vector<8x8xbf16>
    %c8 = arith.constant 8 : index
    %c0_19 = arith.constant 0 : index
    %51 = vector.load %arg3[%c8, %c0_19] : memref<32x32xbf16, #tpu.memory_space<vmem>>, vector<8x32xbf16>
    %cst_20 = arith.constant dense<0.000000e+00> : vector<8x32xf32>
    %52 = tpu.matmul %50, %51, %cst_20 {dimension_numbers = #tpu.dot_dimension_numbers<[1], [0], [0], [1], [0, 0, 1, 1], [], []>} : vector<8x8xbf16>, vector<8x32xbf16>, vector<8x32xf32> -> vector<8x32xf32>
    %53 = arith.addf %31, %52 : vector<8x32xf32>
    %54 = vector.extract_strided_slice %6 {offsets = [0, 16], sizes = [8, 8], strides = [1, 1]} : vector<8x96xbf16> to vector<8x8xbf16>
    %55 = vector.extract_strided_slice %6 {offsets = [0, 48], sizes = [8, 8], strides = [1, 1]} : vector<8x96xbf16> to vector<8x8xbf16>
    %56 = vector.extract_strided_slice %6 {offsets = [0, 80], sizes = [8, 8], strides = [1, 1]} : vector<8x96xbf16> to vector<8x8xbf16>
    %cst_21 = arith.constant dense<0.000000e+00> : vector<8x8xf32>
    %57 = tpu.matmul %54, %55, %cst_21 {dimension_numbers = #tpu.dot_dimension_numbers<[1], [1], [0], [0], [0, 0, 1, 0], [], []>} : vector<8x8xbf16>, vector<8x8xbf16>, vector<8x8xf32> -> vector<8x8xf32>
    %cst_22 = arith.constant 0.353553385 : f32
    %58 = vector.broadcast %cst_22 : f32 to vector<8x8xf32>
    %59 = arith.mulf %57, %58 : vector<8x8xf32>
    %cst_23 = arith.constant dense<0xFF800000> : vector<8xf32>
    %60 = vector.multi_reduction <maximumf>, %59, %cst_23 [1] : vector<8x8xf32> to vector<8xf32>
    %61 = vector.shape_cast %60 : vector<8xf32> to vector<8x1xf32>
    %62 = vector.broadcast %61 : vector<8x1xf32> to vector<8x8xf32>
    %63 = arith.subf %59, %62 : vector<8x8xf32>
    %64 = math.exp %63 : vector<8x8xf32>
    %cst_24 = arith.constant dense<0.000000e+00> : vector<8xf32>
    %65 = vector.multi_reduction <add>, %64, %cst_24 [1] : vector<8x8xf32> to vector<8xf32>
    %66 = vector.shape_cast %65 : vector<8xf32> to vector<8x1xf32>
    %67 = tpu.reciprocal %66 {approx = true} : vector<8x1xf32> -> vector<8x1xf32>
    %68 = vector.broadcast %67 : vector<8x1xf32> to vector<8x8xf32>
    %69 = arith.mulf %64, %68 : vector<8x8xf32>
    %70 = arith.truncf %69 : vector<8x8xf32> to vector<8x8xbf16>
    %cst_25 = arith.constant dense<0.000000e+00> : vector<8x8xf32>
    %71 = tpu.matmul %70, %56, %cst_25 {dimension_numbers = #tpu.dot_dimension_numbers<[1], [0], [0], [1], [0, 0, 1, 1], [], []>} : vector<8x8xbf16>, vector<8x8xbf16>, vector<8x8xf32> -> vector<8x8xf32>
    %72 = arith.truncf %71 : vector<8x8xf32> to vector<8x8xbf16>
    %c16 = arith.constant 16 : index
    %c0_26 = arith.constant 0 : index
    %73 = vector.load %arg3[%c16, %c0_26] : memref<32x32xbf16, #tpu.memory_space<vmem>>, vector<8x32xbf16>
    %cst_27 = arith.constant dense<0.000000e+00> : vector<8x32xf32>
    %74 = tpu.matmul %72, %73, %cst_27 {dimension_numbers = #tpu.dot_dimension_numbers<[1], [0], [0], [1], [0, 0, 1, 1], [], []>} : vector<8x8xbf16>, vector<8x32xbf16>, vector<8x32xf32> -> vector<8x32xf32>
    %75 = arith.addf %53, %74 : vector<8x32xf32>
    %76 = vector.extract_strided_slice %6 {offsets = [0, 24], sizes = [8, 8], strides = [1, 1]} : vector<8x96xbf16> to vector<8x8xbf16>
    %77 = vector.extract_strided_slice %6 {offsets = [0, 56], sizes = [8, 8], strides = [1, 1]} : vector<8x96xbf16> to vector<8x8xbf16>
    %78 = vector.extract_strided_slice %6 {offsets = [0, 88], sizes = [8, 8], strides = [1, 1]} : vector<8x96xbf16> to vector<8x8xbf16>
    %cst_28 = arith.constant dense<0.000000e+00> : vector<8x8xf32>
    %79 = tpu.matmul %76, %77, %cst_28 {dimension_numbers = #tpu.dot_dimension_numbers<[1], [1], [0], [0], [0, 0, 1, 0], [], []>} : vector<8x8xbf16>, vector<8x8xbf16>, vector<8x8xf32> -> vector<8x8xf32>
    %cst_29 = arith.constant 0.353553385 : f32
    %80 = vector.broadcast %cst_29 : f32 to vector<8x8xf32>
    %81 = arith.mulf %79, %80 : vector<8x8xf32>
    %cst_30 = arith.constant dense<0xFF800000> : vector<8xf32>
    %82 = vector.multi_reduction <maximumf>, %81, %cst_30 [1] : vector<8x8xf32> to vector<8xf32>
    %83 = vector.shape_cast %82 : vector<8xf32> to vector<8x1xf32>
    %84 = vector.broadcast %83 : vector<8x1xf32> to vector<8x8xf32>
    %85 = arith.subf %81, %84 : vector<8x8xf32>
    %86 = math.exp %85 : vector<8x8xf32>
    %cst_31 = arith.constant dense<0.000000e+00> : vector<8xf32>
    %87 = vector.multi_reduction <add>, %86, %cst_31 [1] : vector<8x8xf32> to vector<8xf32>
    %88 = vector.shape_cast %87 : vector<8xf32> to vector<8x1xf32>
    %89 = tpu.reciprocal %88 {approx = true} : vector<8x1xf32> -> vector<8x1xf32>
    %90 = vector.broadcast %89 : vector<8x1xf32> to vector<8x8xf32>
    %91 = arith.mulf %86, %90 : vector<8x8xf32>
    %92 = arith.truncf %91 : vector<8x8xf32> to vector<8x8xbf16>
    %cst_32 = arith.constant dense<0.000000e+00> : vector<8x8xf32>
    %93 = tpu.matmul %92, %78, %cst_32 {dimension_numbers = #tpu.dot_dimension_numbers<[1], [0], [0], [1], [0, 0, 1, 1], [], []>} : vector<8x8xbf16>, vector<8x8xbf16>, vector<8x8xf32> -> vector<8x8xf32>
    %94 = arith.truncf %93 : vector<8x8xf32> to vector<8x8xbf16>
    %c24 = arith.constant 24 : index
    %c0_33 = arith.constant 0 : index
    %95 = vector.load %arg3[%c24, %c0_33] : memref<32x32xbf16, #tpu.memory_space<vmem>>, vector<8x32xbf16>
    %cst_34 = arith.constant dense<0.000000e+00> : vector<8x32xf32>
    %96 = tpu.matmul %94, %95, %cst_34 {dimension_numbers = #tpu.dot_dimension_numbers<[1], [0], [0], [1], [0, 0, 1, 1], [], []>} : vector<8x8xbf16>, vector<8x32xbf16>, vector<8x32xf32> -> vector<8x32xf32>
    %97 = arith.addf %75, %96 : vector<8x32xf32>
    %c0_35 = arith.constant 0 : index
    %c0_36 = arith.constant 0 : index
    %98 = vector.load %arg5[%c0_35, %c0_36] : memref<8x32xf32, #tpu.memory_space<vmem>>, vector<8x32xf32>
    tpu.vector_store %arg5[%c0_35, %c0_36], %97 {strides = array<i32>} : memref<8x32xf32, #tpu.memory_space<vmem>>, vector<8x32xf32>,
    return
  }
  func.func @transform_0(%arg0: i32) -> (i32, i32) {
    %c0_i32 = arith.constant 0 : i32
    %c0_i32_0 = arith.constant 0 : i32
    return %arg0, %c0_i32 : i32, i32
  }
  func.func @transform_1(%arg0: i32) -> (i32, i32) {
    %c0_i32 = arith.constant 0 : i32
    %c0_i32_0 = arith.constant 0 : i32
    %c0_i32_1 = arith.constant 0 : i32
    return %c0_i32, %c0_i32_0 : i32, i32
  }
  func.func @transform_2(%arg0: i32) -> (i32, i32) {
    %c0_i32 = arith.constant 0 : i32
    %c0_i32_0 = arith.constant 0 : i32
    %c0_i32_1 = arith.constant 0 : i32
    return %c0_i32, %c0_i32_0 : i32, i32
  }
  func.func @transform_3(%arg0: i32) -> (i32, i32) {
    %c0_i32 = arith.constant 0 : i32
    %c0_i32_0 = arith.constant 0 : i32
    %c0_i32_1 = arith.constant 0 : i32
    return %c0_i32, %c0_i32_0 : i32, i32
  }
  func.func @transform_4(%arg0: i32) -> (i32, i32) {
    %c0_i32 = arith.constant 0 : i32
    %c0_i32_0 = arith.constant 0 : i32
    return %arg0, %c0_i32 : i32, i32
  }
}

</mosaic_0001>

<llo_original>
// kernel: tpu_custom_call.1
$region0: #{tpu_custom_call.1}
  #allocation0 [shape = 'u32[]', space=smem, size = 0x4, offset = 0x4, fixed_abs, tag = 'smem constant byte address 0x4 - core index']
  #allocation1 [shape = 'u32[144,128]{1,0:T(1,128)}', space=vmem, size = 0x12000, scoped, tag = 'internal scratch']
  %s0 = inlined_call_operand.hbm [shape: bf16[16,32], index: 0, kind: input, shape index: {}]
  %s1 = inlined_call_operand.hbm [shape: bf16[32,96], index: 1, kind: input, shape index: {}]
  %s2 = inlined_call_operand.hbm [shape: bf16[32,32], index: 2, kind: input, shape index: {}]
  %s3 = inlined_call_operand.vmem [shape: f32[2,96], index: 3, kind: input, shape index: {}]
  %s4 = inlined_call_operand.hbm [shape: f32[16,32], index: 4, kind: output, shape index: {}]
  %s5 = sld [smem:[#allocation0]]
  $region61: #{tpu_custom_call.1} parent=0
    _
  %s7 = ssub.s32 1, %s5
  %s8 = scalar_select 0, %s7, %s5
  $region1: #{tpu_custom_call.1} parent=0
    #allocation2 [shape = 'u8[4096]{0}', space=vmem, size = 0x1000, scoped, tag = 'input window, operand 0']
    #allocation3 [shape = 's32[2]{0}', space=sflag, size = 0x8, scoped, tag = 'scoped memory for tpu_custom_call.1']
    #allocation4 [shape = 's32[2]{0}', space=sflag, size = 0x8, scoped, tag = 'scoped memory for tpu_custom_call.1']
    #allocation5 [shape = 'u8[8192]{0}', space=vmem, size = 0x2000, scoped, tag = 'input window, operand 1, single buffered']
    #allocation6 [shape = 's32[1]{0}', space=sflag, size = 0x4, scoped, tag = 'scoped memory for tpu_custom_call.1']
    #allocation7 [shape = 'u8[8192]{0}', space=vmem, size = 0x2000, scoped, tag = 'input window, operand 2, single buffered']
    #allocation8 [shape = 'u8[8192]{0}', space=vmem, size = 0x2000, scoped, tag = 'output window, operand 0']
    %9 = vsyncpa [#allocation3], 0
    %s10 = scalar_lea.sflag [#allocation3], 1
    %11 = vsyncpa %s10, 0
    %12 = vsyncpa [#allocation6], 0
    %13 = vsyncpa [#allocation4], 0
    %s14 = scalar_lea.sflag [#allocation4], 1
    %15 = vsyncpa %s14, 0
    loop: start=0, step=1, limit=4
    $region2: #{tpu_custom_call.1} parent=1 // loop_pre_header
      _
    $region3: #{tpu_custom_call.1} parent=1 // loop_header
      %s17 = sphi 0, %s21
      %p18 = scmp.ge.s32.totalorder %s17, 4
      %s27 = sphi 0, %s29
      %s30 = sphi 0, %s27
      %s31 = sphi 0, %s30
      %s47 = sphi 0, %s31
      %s51 = sphi 0, %s51
      %s53 = sphi 0, %s51
      %s54 = sphi 0, %s53
      %s68 = sphi 0, %s54
      %s72 = sphi 0, %s72
      %s74 = sphi 0, %s72
      %s75 = sphi 0, %s74
      %s89 = sphi 0, %s75
      %s93 = sphi 0, %s93
      %s95 = sphi 0, %s93
      %s96 = sphi 0, %s95
      %s110 = sphi 0, %s96
      %s116 = sphi 0, %s118
      %s119 = sphi 0, %s116
      %s120 = sphi 0, %s119
      %s136 = sphi 0, %s120
    $region4: #{tpu_custom_call.1} parent=1 // loop_header_branch
      %20 = sbr.rel (%p18) target = $region8
    $region5: #{tpu_custom_call.1} parent=1 // loop_body
      %s22 = ssub.s32 %s17, 1
      %s23 = ssub.s32 %s17, 2
      %s24 = sadd.s32 %s17, 1
      %s25 = ssub.s32 %s17, %s24
      %p26 = scmp.eq.s32.totalorder %s25, 0
      %s28 = sadd.s32 %s27, 1
      %s29 = scalar_select %p26, %s27, %s28
      %p32 = pneg %p26
      %p33 = scmp.eq.s32.totalorder %s17, 1
      %p34 = por %p32, %p33
      %p35 = scmp.ne.s32.totalorder %s27, %s30
      %p36 = scmp.eq.s32.totalorder %s17, 0
      %p37 = por %p35, %p36
      %p38 = scmp.ne.s32.totalorder %s27, %s30
      %p39 = scmp.eq.s32.totalorder %s22, 1
      %p40 = por %p38, %p39
      %p41 = scmp.ne.s32.totalorder %s30, %s31
      %p42 = scmp.eq.s32.totalorder %s22, 0
      %p43 = por %p41, %p42
      %p44 = scmp.ne.s32.totalorder %s30, %s31
      %p45 = scmp.eq.s32.totalorder %s23, 1
      %p46 = por %p44, %p45
      %p48 = scmp.ne.s32.totalorder %s31, %s47
      %p49 = scmp.eq.s32.totalorder %s23, 0
      %p50 = por %p48, %p49
      %s52 = sadd.s32 %s51, 1
      %p55 = scmp.eq.s32.totalorder %s17, 1
      %p56 = scmp.ne.s32.totalorder %s51, %s53
      %p57 = scmp.eq.s32.totalorder %s17, 0
      %p58 = por %p56, %p57
      %p59 = scmp.ne.s32.totalorder %s51, %s53
      %p60 = scmp.eq.s32.totalorder %s22, 1
      %p61 = por %p59, %p60
      %p62 = scmp.ne.s32.totalorder %s53, %s54
      %p63 = scmp.eq.s32.totalorder %s22, 0
      %p64 = por %p62, %p63
      %p65 = scmp.ne.s32.totalorder %s53, %s54
      %p66 = scmp.eq.s32.totalorder %s23, 1
      %p67 = por %p65, %p66
      %p69 = scmp.ne.s32.totalorder %s54, %s68
      %p70 = scmp.eq.s32.totalorder %s23, 0
      %p71 = por %p69, %p70
      %s73 = sadd.s32 %s72, 1
      %p76 = scmp.eq.s32.totalorder %s17, 1
      %p77 = scmp.ne.s32.totalorder %s72, %s74
      %p78 = scmp.eq.s32.totalorder %s17, 0
      %p79 = por %p77, %p78
      %p80 = scmp.ne.s32.totalorder %s72, %s74
      %p81 = scmp.eq.s32.totalorder %s22, 1
      %p82 = por %p80, %p81
      %p83 = scmp.ne.s32.totalorder %s74, %s75
      %p84 = scmp.eq.s32.totalorder %s22, 0
      %p85 = por %p83, %p84
      %p86 = scmp.ne.s32.totalorder %s74, %s75
      %p87 = scmp.eq.s32.totalorder %s23, 1
      %p88 = por %p86, %p87
      %p90 = scmp.ne.s32.totalorder %s75, %s89
      %p91 = scmp.eq.s32.totalorder %s23, 0
      %p92 = por %p90, %p91
      %s94 = sadd.s32 %s93, 1
      %p97 = scmp.eq.s32.totalorder %s17, 1
      %p98 = scmp.ne.s32.totalorder %s93, %s95
      %p99 = scmp.eq.s32.totalorder %s17, 0
      %p100 = por %p98, %p99
      %p101 = scmp.ne.s32.totalorder %s93, %s95
      %p102 = scmp.eq.s32.totalorder %s22, 1
      %p103 = por %p101, %p102
      %p104 = scmp.ne.s32.totalorder %s95, %s96
      %p105 = scmp.eq.s32.totalorder %s22, 0
      %p106 = por %p104, %p105
      %p107 = scmp.ne.s32.totalorder %s95, %s96
      %p108 = scmp.eq.s32.totalorder %s23, 1
      %p109 = por %p107, %p108
      %p111 = scmp.ne.s32.totalorder %s96, %s110
      %p112 = scmp.eq.s32.totalorder %s23, 0
      %p113 = por %p111, %p112
      %s114 = ssub.s32 %s17, %s24
      %p115 = scmp.eq.s32.totalorder %s114, 0
      %s117 = sadd.s32 %s116, 1
      %s118 = scalar_select %p115, %s116, %s117
      %p121 = pneg %p115
      %p122 = scmp.eq.s32.totalorder %s17, 1
      %p123 = por %p121, %p122
      %p124 = scmp.ne.s32.totalorder %s116, %s119
      %p125 = scmp.eq.s32.totalorder %s17, 0
      %p126 = por %p124, %p125
      %p127 = scmp.ne.s32.totalorder %s116, %s119
      %p128 = scmp.eq.s32.totalorder %s22, 1
      %p129 = por %p127, %p128
      %p130 = scmp.ne.s32.totalorder %s119, %s120
      %p131 = scmp.eq.s32.totalorder %s22, 0
      %p132 = por %p130, %p131
      %p133 = scmp.ne.s32.totalorder %s119, %s120
      %p134 = scmp.eq.s32.totalorder %s23, 1
      %p135 = por %p133, %p134
      %p137 = scmp.ne.s32.totalorder %s120, %s136
      %p138 = scmp.eq.s32.totalorder %s23, 0
      %p139 = por %p137, %p138
      %p140 = scmp.le.s32.totalorder 1, %s17
      %p141 = scmp.lt.s32.totalorder %s17, 3
      %p142 = pnand %p140, %p141
      %p143 = pneg %p142
      // Predicated region
      $region9: #{tpu_custom_call.1} parent=5 // pred_check
        _
      $region10: #{tpu_custom_call.1} parent=5 // pred_check_branch
        %145 = sbr.rel (%p142) target = $region12
      $region11: #{tpu_custom_call.1} parent=5 // pred_region
        %s146 = ssub.s32 %s17, 1
        // Predicated region
        $region13: #{tpu_custom_call.1} parent=11 // pred_check
          %p147 = pneg %p64
        $region14: #{tpu_custom_call.1} parent=11 // pred_check_branch
          %149 = sbr.rel (%p147) target = $region16
        $region15: #{tpu_custom_call.1} parent=11 // pred_region
          %s151 = ssub.s32 256, 256
          %152 = vsyncadd [#allocation6], %s151
          %s153 = sshll.u32 [#allocation5], 4
          %s154 = int_to_ptr.vmem [resolvable:$true] %s153
          %159 = dma.hbm_to_vmem [thread:$0]  %s1, 256, %s154, [#allocation6], 64, 64, 4
        $region16: #{tpu_custom_call.1} parent=11 // pred_fallthru
          _
        // Predicated region
        $region17: #{tpu_custom_call.1} parent=11 // pred_check
          %p160 = pneg %p85
        $region18: #{tpu_custom_call.1} parent=11 // pred_check_branch
          %162 = sbr.rel (%p160) target = $region20
        $region19: #{tpu_custom_call.1} parent=11 // pred_region
          %s164 = ssub.s32 256, 256
          %165 = vsyncadd [#allocation6], %s164
          %s166 = sshll.u32 [#allocation7], 4
          %s167 = int_to_ptr.vmem [resolvable:$true] %s166
          %172 = dma.hbm_to_vmem [thread:$0]  %s2, 256, %s167, [#allocation6], 64, 64, 4
        $region20: #{tpu_custom_call.1} parent=11 // pred_fallthru
          _
        // Predicated region
        $region21: #{tpu_custom_call.1} parent=11 // pred_check
          %p173 = pneg %p106
        $region22: #{tpu_custom_call.1} parent=11 // pred_check_branch
          %175 = sbr.rel (%p173) target = $region24
        $region23: #{tpu_custom_call.1} parent=11 // pred_region
          _
        $region24: #{tpu_custom_call.1} parent=11 // pred_fallthru
          _
      $region12: #{tpu_custom_call.1} parent=5 // pred_fallthru
        _
      %p176 = scmp.lt.s32.totalorder %s17, 2
      // Predicated region
      $region25: #{tpu_custom_call.1} parent=5 // pred_check
        %p177 = pneg %p176
      $region26: #{tpu_custom_call.1} parent=5 // pred_check_branch
        %179 = sbr.rel (%p177) target = $region28
      $region27: #{tpu_custom_call.1} parent=5 // pred_region
        // Predicated region
        $region29: #{tpu_custom_call.1} parent=27 // pred_check
          %p180 = pneg %p37
        $region30: #{tpu_custom_call.1} parent=27 // pred_check_branch
          %182 = sbr.rel (%p180) target = $region32
        $region31: #{tpu_custom_call.1} parent=27 // pred_region
          %s183 = sand.u32 %s27, 1
          %s184 = scalar_lea.sflag [#allocation3], %s183
          %s185 = sand.u32 %s27, 1
          %s186 = smul.addr %s185, 4
          %s187 = scalar_lea.vmem [#allocation2], %s186
          %s189 = ssub.s32 64, 64
          %190 = vsyncadd %s184, %s189
          %s191 = smul.addr %s17, 64
          %s192 = scalar_lea.hbm %s0, %s191
          %s194 = sshll.u32 %s187, 4
          %s195 = int_to_ptr.vmem [resolvable:$true] %s194
          %197 = dma.hbm_to_vmem [thread:$0]  %s192, 64, %s195, %s184
        $region32: #{tpu_custom_call.1} parent=27 // pred_fallthru
          _
      $region28: #{tpu_custom_call.1} parent=5 // pred_fallthru
        _
      %p198 = scmp.le.s32.totalorder 1, %s17
      %p199 = scmp.lt.s32.totalorder %s17, 3
      %p200 = pnand %p198, %p199
      %p201 = pneg %p200
      // Predicated region
      $region33: #{tpu_custom_call.1} parent=5 // pred_check
        _
      $region34: #{tpu_custom_call.1} parent=5 // pred_check_branch
        %203 = sbr.rel (%p200) target = $region36
      $region35: #{tpu_custom_call.1} parent=5 // pred_region
        %s204 = ssub.s32 %s17, 1
        %s205 = sand.u32 %s30, 1
        %s206 = scalar_lea.sflag [#allocation3], %s205
        %s207 = sand.u32 %s30, 1
        %s208 = smul.addr %s207, 4
        %s209 = scalar_lea.vmem [#allocation2], %s208
        // Predicated region
        $region37: #{tpu_custom_call.1} parent=35 // pred_check
          %p210 = pneg %p43
        $region38: #{tpu_custom_call.1} parent=35 // pred_check_branch
          %212 = sbr.rel (%p210) target = $region40
        $region39: #{tpu_custom_call.1} parent=35 // pred_region
          %213 = dma.done %s206, 64
        $region40: #{tpu_custom_call.1} parent=35 // pred_fallthru
          _
        // Predicated region
        $region41: #{tpu_custom_call.1} parent=35 // pred_check
          %p214 = pneg %p64
        $region42: #{tpu_custom_call.1} parent=35 // pred_check_branch
          %216 = sbr.rel (%p214) target = $region44
        $region43: #{tpu_custom_call.1} parent=35 // pred_region
          %217 = dma.done [#allocation6], 256
        $region44: #{tpu_custom_call.1} parent=35 // pred_fallthru
          _
        // Predicated region
        $region45: #{tpu_custom_call.1} parent=35 // pred_check
          %p218 = pneg %p85
        $region46: #{tpu_custom_call.1} parent=35 // pred_check_branch
          %220 = sbr.rel (%p218) target = $region48
        $region47: #{tpu_custom_call.1} parent=35 // pred_region
          %221 = dma.done [#allocation6], 256
        $region48: #{tpu_custom_call.1} parent=35 // pred_fallthru
          _
        %s222 = sand.u32 %s30, 1
        %s223 = scalar_lea.sflag [#allocation3], %s222
        %s224 = sand.u32 %s30, 1
        %s225 = smul.addr %s224, 4
        %s226 = scalar_lea.vmem [#allocation2], %s225
        %p227 = pneg %p43
        %p228 = pneg %p40
        %p229 = pneg %p64
        %p230 = pneg %p61
        %p231 = pneg %p85
        %p232 = pneg %p82
        %p233 = pneg %p106
        %p234 = pneg %p103
        %p235 = pneg %p132
        %p236 = pneg %p129
        %s237 = sand.u32 %s119, 1
        %s238 = scalar_lea.sflag [#allocation4], %s237
        %s239 = sand.u32 %s119, 1
        %s240 = smul.addr %s239, 8
        %s241 = scalar_lea.vmem [#allocation8], %s240
        %v243 = vld [vmem:[%s209] sm:$0xf]
        %v244 = vld [vmem:[#allocation5] sm:$0xf]
        %v245 = vld [vmem:[#allocation5 + $0x4] sm:$0xf]
        %v246 = vld [vmem:[#allocation5 + $0x8] sm:$0xf]
        %v247 = vld [vmem:[#allocation5 + $0xc] sm:$0xf]
        %v248 = vld [vmem:[%s3] sm:$0x1]
        %v249 = vlaneseq
        %v250 = vshrl.u32 %v249, 7
        %v251 = vsub.s32 0, %v250
        %v252 = vrot.slane %v248, %v251
        %v257 = vunpack.c.l.b16 %v244
        %v258 = vunpack.c.l.b16 %v245
        %v259 = vunpack.c.l.b16 %v246
        %v260 = vunpack.c.l.b16 %v247
        %v261 = vpack.c.b16 %v258, %v257
        %v262 = vpack.c.b16 %v260, %v259
        %vm265 = vcmask 261120
        %v267 = vsel %vm265, %v243, 0
        %269 = vmatprep.subr.bf16.mxu0 0
        %270 = vmatpush1.bf16.msra.mxu0 %v261
        %271 = vmatprep.subr.bf16.mxu0 0
        %272 = vmatpush1.bf16.msra.mxu0 %v262
        %273 = vmatprep.subr.bf16.mxu0 0
        %274 = vmatpush1.bf16.msra.mxu0 0
        %275 = vmatprep.subr.bf16.mxu0 0
        %276 = vmatpush1.bf16.msra.mxu0 0
        %277 = vmatprep.subr.bf16.mxu0 0
        %278 = vmatpush1.bf16.msra.mxu0 0
        %279 = vmatprep.subr.bf16.mxu0 0
        %280 = vmatpush1.bf16.msra.mxu0 0
        %281 = vmatprep.subr.bf16.mxu0 0
        %282 = vmatpush1.bf16.msra.mxu0 0
        %283 = vmatprep.subr.bf16.mxu0 0
        %284 = vmatpush1.bf16.msra.mxu0 0
        %285 = vmatprep.subr.bf16.mxu0 0
        %286 = vmatpush1.bf16.msra.mxu0 0
        %287 = vmatprep.subr.bf16.mxu0 0
        %288 = vmatpush1.bf16.msra.mxu0 0
        %289 = vmatprep.subr.bf16.mxu0 0
        %290 = vmatpush1.bf16.msra.mxu0 0
        %291 = vmatprep.subr.bf16.mxu0 0
        %292 = vmatpush1.bf16.msra.mxu0 0
        %293 = vmatprep.subr.bf16.mxu0 0
        %294 = vmatpush1.bf16.msra.mxu0 0
        %295 = vmatprep.subr.bf16.mxu0 0
        %296 = vmatpush1.bf16.msra.mxu0 0
        %297 = vmatprep.subr.bf16.mxu0 0
        %298 = vmatpush1.bf16.msra.mxu0 0
        %299 = vmatprep.subr.bf16.mxu0 0
        %300 = vmatpush1.bf16.msra.mxu0 0
        %301 = vmatprep.mubr.bf16.mxu0 0
        %302 = vmatmul.mubr.bf16.gmra.mrb[0].mxu0 %v267
        %v303 = vpop.f32.mrb[0].mxu0
        %v304 = vadd.f32 %v252, %v303
        %v305 = vpop.f32.mrb[0].mxu0
        %v306 = vpop.f32.mrb[0].mxu0
        %v307 = vpop.f32.mrb[0].mxu0
        %308 = vdwg.mxu0
        %v309 = vpack.c.bf16 %v304, %v304
        %v310 = vld [vmem:[%s3 + $0x1] sm:$0x1]
        %v311 = vlaneseq
        %v312 = vshrl.u32 %v311, 7
        %v313 = vsub.s32 0, %v312
        %v314 = vrot.slane %v310, %v313
        %316 = vrot.lane.b32.xlu0 %v309, 96
        %v317 = vpop.permute.xlu0 %316
        %vm318 = vcmask 64512
        %v320 = vsel %vm318, %v309, 0
        %v323 = vsel %vm318, %v317, 0
        %325 = vmatprep.subr.bf16.mxu0 0
        %326 = vmatpush1.bf16.xpose.msra.mxu0 %v323
        %327 = vmatprep.subr.bf16.mxu0 0
        %328 = vmatpush1.bf16.xpose.msra.mxu0 0
        %329 = vmatprep.subr.bf16.mxu0 0
        %330 = vmatpush1.bf16.xpose.msra.mxu0 0
        %331 = vmatprep.subr.bf16.mxu0 0
        %332 = vmatpush1.bf16.xpose.msra.mxu0 0
        %333 = vmatprep.subr.bf16.mxu0 0
        %334 = vmatpush1.bf16.xpose.msra.mxu0 0
        %335 = vmatprep.subr.bf16.mxu0 0
        %336 = vmatpush1.bf16.xpose.msra.mxu0 0
        %337 = vmatprep.subr.bf16.mxu0 0
        %338 = vmatpush1.bf16.xpose.msra.mxu0 0
        %339 = vmatprep.subr.bf16.mxu0 0
        %340 = vmatpush1.bf16.xpose.msra.mxu0 0
        %341 = vmatprep.subr.bf16.mxu0 0
        %342 = vmatpush1.bf16.xpose.msra.mxu0 0
        %343 = vmatprep.subr.bf16.mxu0 0
        %344 = vmatpush1.bf16.xpose.msra.mxu0 0
        %345 = vmatprep.subr.bf16.mxu0 0
        %346 = vmatpush1.bf16.xpose.msra.mxu0 0
        %347 = vmatprep.subr.bf16.mxu0 0
        %348 = vmatpush1.bf16.xpose.msra.mxu0 0
        %349 = vmatprep.subr.bf16.mxu0 0
        %350 = vmatpush1.bf16.xpose.msra.mxu0 0
        %351 = vmatprep.subr.bf16.mxu0 0
        %352 = vmatpush1.bf16.xpose.msra.mxu0 0
        %353 = vmatprep.subr.bf16.mxu0 0
        %354 = vmatpush1.bf16.xpose.msra.mxu0 0
        %355 = vmatprep.subr.bf16.mxu0 0
        %356 = vmatpush1.bf16.xpose.msra.mxu0 0
        %357 = vmatprep.mubr.bf16.mxu0 0
        %358 = vmatmul.mubr.bf16.gmra.mrb[0].mxu0 %v320
        %v359 = vpop.f32.mrb[0].mxu0
        %v360 = vadd.f32 0.0, %v359
        %v361 = vpop.f32.mrb[0].mxu0
        %v362 = vpop.f32.mrb[0].mxu0
        %v363 = vpop.f32.mrb[0].mxu0
        %364 = vdwg.mxu0
        %v365 = vmul.f32 %v360, 0.35355338
        %v366 = vsel %vm318, %v365, -inf
        %367 = vmax.xlane.f32.xlu0 %v366
        %v368 = vpop.xlane.xlu0 %367
        %v369 = vsub.f32 %v365, %v368
        %v370 = vmul.f32 %v369, 1.442695
        %v371 = vpow.pop %v370
        %v372 = vsel %vm318, %v371, 0.0
        %373 = vadd.xlane.f32.xlu0 %v372
        %v374 = vpop.xlane.xlu0 %373
        %v375 = vrcp.pop %v374
        %v376 = vmul.f32 %v371, %v375
        %v377 = vpack.c.bf16 %v376, %v376
        %378 = vrot.lane.b32.xlu0 %v309, 64
        %v379 = vpop.permute.xlu0 %378
        %v381 = vsel %vm318, %v377, 0
        %vm383 = vcmask 1043456
        %v385 = vsel %vm383, %v379, 0
        %387 = vmatprep.subr.bf16.mxu0 0
        %388 = vmatpush1.bf16.msra.mxu0 %v385
        %389 = vmatprep.subr.bf16.mxu0 0
        %390 = vmatpush1.bf16.msra.mxu0 0
        %391 = vmatprep.subr.bf16.mxu0 0
        %392 = vmatpush1.bf16.msra.mxu0 0
        %393 = vmatprep.subr.bf16.mxu0 0
        %394 = vmatpush1.bf16.msra.mxu0 0
        %395 = vmatprep.subr.bf16.mxu0 0
        %396 = vmatpush1.bf16.msra.mxu0 0
        %397 = vmatprep.subr.bf16.mxu0 0
        %398 = vmatpush1.bf16.msra.mxu0 0
        %399 = vmatprep.subr.bf16.mxu0 0
        %400 = vmatpush1.bf16.msra.mxu0 0
        %401 = vmatprep.subr.bf16.mxu0 0
        %402 = vmatpush1.bf16.msra.mxu0 0
        %403 = vmatprep.subr.bf16.mxu0 0
        %404 = vmatpush1.bf16.msra.mxu0 0
        %405 = vmatprep.subr.bf16.mxu0 0
        %406 = vmatpush1.bf16.msra.mxu0 0
        %407 = vmatprep.subr.bf16.mxu0 0
        %408 = vmatpush1.bf16.msra.mxu0 0
        %409 = vmatprep.subr.bf16.mxu0 0
        %410 = vmatpush1.bf16.msra.mxu0 0
        %411 = vmatprep.subr.bf16.mxu0 0
        %412 = vmatpush1.bf16.msra.mxu0 0
        %413 = vmatprep.subr.bf16.mxu0 0
        %414 = vmatpush1.bf16.msra.mxu0 0
        %415 = vmatprep.subr.bf16.mxu0 0
        %416 = vmatpush1.bf16.msra.mxu0 0
        %417 = vmatprep.subr.bf16.mxu0 0
        %418 = vmatpush1.bf16.msra.mxu0 0
        %419 = vmatprep.mubr.bf16.mxu0 0
        %420 = vmatmul.mubr.bf16.gmra.mrb[0].mxu0 %v381
        %v421 = vpop.f32.mrb[0].mxu0
        %v422 = vadd.f32 0.0, %v421
        %v423 = vpop.f32.mrb[0].mxu0
        %v424 = vpop.f32.mrb[0].mxu0
        %v425 = vpop.f32.mrb[0].mxu0
        %426 = vdwg.mxu0
        %v427 = vpack.c.bf16 %v422, %v422
        %v428 = vld [vmem:[#allocation7] sm:$0xf]
        %v430 = vsel %vm318, %v427, 0
        %v433 = vsel %vm383, %v428, 0
        %435 = vmatprep.subr.bf16.mxu0 0
        %436 = vmatpush1.bf16.msra.mxu0 %v433
        %437 = vmatprep.subr.bf16.mxu0 0
        %438 = vmatpush1.bf16.msra.mxu0 0
        %439 = vmatprep.subr.bf16.mxu0 0
        %440 = vmatpush1.bf16.msra.mxu0 0
        %441 = vmatprep.subr.bf16.mxu0 0
        %442 = vmatpush1.bf16.msra.mxu0 0
        %443 = vmatprep.subr.bf16.mxu0 0
        %444 = vmatpush1.bf16.msra.mxu0 0
        %445 = vmatprep.subr.bf16.mxu0 0
        %446 = vmatpush1.bf16.msra.mxu0 0
        %447 = vmatprep.subr.bf16.mxu0 0
        %448 = vmatpush1.bf16.msra.mxu0 0
        %449 = vmatprep.subr.bf16.mxu0 0
        %450 = vmatpush1.bf16.msra.mxu0 0
        %451 = vmatprep.subr.bf16.mxu0 0
        %452 = vmatpush1.bf16.msra.mxu0 0
        %453 = vmatprep.subr.bf16.mxu0 0
        %454 = vmatpush1.bf16.msra.mxu0 0
        %455 = vmatprep.subr.bf16.mxu0 0
        %456 = vmatpush1.bf16.msra.mxu0 0
        %457 = vmatprep.subr.bf16.mxu0 0
        %458 = vmatpush1.bf16.msra.mxu0 0
        %459 = vmatprep.subr.bf16.mxu0 0
        %460 = vmatpush1.bf16.msra.mxu0 0
        %461 = vmatprep.subr.bf16.mxu0 0
        %462 = vmatpush1.bf16.msra.mxu0 0
        %463 = vmatprep.subr.bf16.mxu0 0
        %464 = vmatpush1.bf16.msra.mxu0 0
        %465 = vmatprep.subr.bf16.mxu0 0
        %466 = vmatpush1.bf16.msra.mxu0 0
        %467 = vmatprep.mubr.bf16.mxu0 0
        %468 = vmatmul.mubr.bf16.gmra.mrb[0].mxu0 %v430
        %v469 = vpop.f32.mrb[0].mxu0
        %v470 = vadd.f32 0.0, %v469
        %v471 = vpop.f32.mrb[0].mxu0
        %v472 = vpop.f32.mrb[0].mxu0
        %v473 = vpop.f32.mrb[0].mxu0
        %474 = vdwg.mxu0
        %v475 = vadd.f32 %v314, %v470
        %476 = vrot.lane.b32.xlu0 %v309, 120
        %v477 = vpop.permute.xlu0 %476
        %478 = vrot.lane.b32.xlu0 %v309, 88
        %v479 = vpop.permute.xlu0 %478
        %v481 = vsel %vm318, %v477, 0
        %v484 = vsel %vm318, %v479, 0
        %486 = vmatprep.subr.bf16.mxu0 0
        %487 = vmatpush1.bf16.xpose.msra.mxu0 %v484
        %488 = vmatprep.subr.bf16.mxu0 0
        %489 = vmatpush1.bf16.xpose.msra.mxu0 0
        %490 = vmatprep.subr.bf16.mxu0 0
        %491 = vmatpush1.bf16.xpose.msra.mxu0 0
        %492 = vmatprep.subr.bf16.mxu0 0
        %493 = vmatpush1.bf16.xpose.msra.mxu0 0
        %494 = vmatprep.subr.bf16.mxu0 0
        %495 = vmatpush1.bf16.xpose.msra.mxu0 0
        %496 = vmatprep.subr.bf16.mxu0 0
        %497 = vmatpush1.bf16.xpose.msra.mxu0 0
        %498 = vmatprep.subr.bf16.mxu0 0
        %499 = vmatpush1.bf16.xpose.msra.mxu0 0
        %500 = vmatprep.subr.bf16.mxu0 0
        %501 = vmatpush1.bf16.xpose.msra.mxu0 0
        %502 = vmatprep.subr.bf16.mxu0 0
        %503 = vmatpush1.bf16.xpose.msra.mxu0 0
        %504 = vmatprep.subr.bf16.mxu0 0
        %505 = vmatpush1.bf16.xpose.msra.mxu0 0
        %506 = vmatprep.subr.bf16.mxu0 0
        %507 = vmatpush1.bf16.xpose.msra.mxu0 0
        %508 = vmatprep.subr.bf16.mxu0 0
        %509 = vmatpush1.bf16.xpose.msra.mxu0 0
        %510 = vmatprep.subr.bf16.mxu0 0
        %511 = vmatpush1.bf16.xpose.msra.mxu0 0
        %512 = vmatprep.subr.bf16.mxu0 0
        %513 = vmatpush1.bf16.xpose.msra.mxu0 0
        %514 = vmatprep.subr.bf16.mxu0 0
        %515 = vmatpush1.bf16.xpose.msra.mxu0 0
        %516 = vmatprep.subr.bf16.mxu0 0
        %517 = vmatpush1.bf16.xpose.msra.mxu0 0
        %518 = vmatprep.mubr.bf16.mxu0 0
        %519 = vmatmul.mubr.bf16.gmra.mrb[0].mxu0 %v481
        %v520 = vpop.f32.mrb[0].mxu0
        %v521 = vadd.f32 0.0, %v520
        %v522 = vpop.f32.mrb[0].mxu0
        %v523 = vpop.f32.mrb[0].mxu0
        %v524 = vpop.f32.mrb[0].mxu0
        %525 = vdwg.mxu0
        %v526 = vmul.f32 %v521, 0.35355338
        %v527 = vsel %vm318, %v526, -inf
        %528 = vmax.xlane.f32.xlu0 %v527
        %v529 = vpop.xlane.xlu0 %528
        %v530 = vsub.f32 %v526, %v529
        %v531 = vmul.f32 %v530, 1.442695
        %v532 = vpow.pop %v531
        %v533 = vsel %vm318, %v532, 0.0
        %534 = vadd.xlane.f32.xlu0 %v533
        %v535 = vpop.xlane.xlu0 %534
        %v536 = vrcp.pop %v535
        %v537 = vmul.f32 %v532, %v536
        %v538 = vpack.c.bf16 %v537, %v537
        %539 = vrot.lane.b32.xlu0 %v309, 56
        %v540 = vpop.permute.xlu0 %539
        %v542 = vsel %vm318, %v538, 0
        %v545 = vsel %vm383, %v540, 0
        %547 = vmatprep.subr.bf16.mxu0 0
        %548 = vmatpush1.bf16.msra.mxu0 %v545
        %549 = vmatprep.subr.bf16.mxu0 0
        %550 = vmatpush1.bf16.msra.mxu0 0
        %551 = vmatprep.subr.bf16.mxu0 0
        %552 = vmatpush1.bf16.msra.mxu0 0
        %553 = vmatprep.subr.bf16.mxu0 0
        %554 = vmatpush1.bf16.msra.mxu0 0
        %555 = vmatprep.subr.bf16.mxu0 0
        %556 = vmatpush1.bf16.msra.mxu0 0
        %557 = vmatprep.subr.bf16.mxu0 0
        %558 = vmatpush1.bf16.msra.mxu0 0
        %559 = vmatprep.subr.bf16.mxu0 0
        %560 = vmatpush1.bf16.msra.mxu0 0
        %561 = vmatprep.subr.bf16.mxu0 0
        %562 = vmatpush1.bf16.msra.mxu0 0
        %563 = vmatprep.subr.bf16.mxu0 0
        %564 = vmatpush1.bf16.msra.mxu0 0
        %565 = vmatprep.subr.bf16.mxu0 0
        %566 = vmatpush1.bf16.msra.mxu0 0
        %567 = vmatprep.subr.bf16.mxu0 0
        %568 = vmatpush1.bf16.msra.mxu0 0
        %569 = vmatprep.subr.bf16.mxu0 0
        %570 = vmatpush1.bf16.msra.mxu0 0
        %571 = vmatprep.subr.bf16.mxu0 0
        %572 = vmatpush1.bf16.msra.mxu0 0
        %573 = vmatprep.subr.bf16.mxu0 0
        %574 = vmatpush1.bf16.msra.mxu0 0
        %575 = vmatprep.subr.bf16.mxu0 0
        %576 = vmatpush1.bf16.msra.mxu0 0
        %577 = vmatprep.subr.bf16.mxu0 0
        %578 = vmatpush1.bf16.msra.mxu0 0
        %579 = vmatprep.mubr.bf16.mxu0 0
        %580 = vmatmul.mubr.bf16.gmra.mrb[0].mxu0 %v542
        %v581 = vpop.f32.mrb[0].mxu0
        %v582 = vadd.f32 0.0, %v581
        %v583 = vpop.f32.mrb[0].mxu0
        %v584 = vpop.f32.mrb[0].mxu0
        %v585 = vpop.f32.mrb[0].mxu0
        %586 = vdwg.mxu0
        %v587 = vpack.c.bf16 %v582, %v582
        %v588 = vld [vmem:[#allocation7 + $0x4] sm:$0xf]
        %v590 = vsel %vm318, %v587, 0
        %v593 = vsel %vm383, %v588, 0
        %595 = vmatprep.subr.bf16.mxu0 0
        %596 = vmatpush1.bf16.msra.mxu0 %v593
        %597 = vmatprep.subr.bf16.mxu0 0
        %598 = vmatpush1.bf16.msra.mxu0 0
        %599 = vmatprep.subr.bf16.mxu0 0
        %600 = vmatpush1.bf16.msra.mxu0 0
        %601 = vmatprep.subr.bf16.mxu0 0
        %602 = vmatpush1.bf16.msra.mxu0 0
        %603 = vmatprep.subr.bf16.mxu0 0
        %604 = vmatpush1.bf16.msra.mxu0 0
        %605 = vmatprep.subr.bf16.mxu0 0
        %606 = vmatpush1.bf16.msra.mxu0 0
        %607 = vmatprep.subr.bf16.mxu0 0
        %608 = vmatpush1.bf16.msra.mxu0 0
        %609 = vmatprep.subr.bf16.mxu0 0
        %610 = vmatpush1.bf16.msra.mxu0 0
        %611 = vmatprep.subr.bf16.mxu0 0
        %612 = vmatpush1.bf16.msra.mxu0 0
        %613 = vmatprep.subr.bf16.mxu0 0
        %614 = vmatpush1.bf16.msra.mxu0 0
        %615 = vmatprep.subr.bf16.mxu0 0
        %616 = vmatpush1.bf16.msra.mxu0 0
        %617 = vmatprep.subr.bf16.mxu0 0
        %618 = vmatpush1.bf16.msra.mxu0 0
        %619 = vmatprep.subr.bf16.mxu0 0
        %620 = vmatpush1.bf16.msra.mxu0 0
        %621 = vmatprep.subr.bf16.mxu0 0
        %622 = vmatpush1.bf16.msra.mxu0 0
        %623 = vmatprep.subr.bf16.mxu0 0
        %624 = vmatpush1.bf16.msra.mxu0 0
        %625 = vmatprep.subr.bf16.mxu0 0
        %626 = vmatpush1.bf16.msra.mxu0 0
        %627 = vmatprep.mubr.bf16.mxu0 0
        %628 = vmatmul.mubr.bf16.gmra.mrb[0].mxu0 %v590
        %v629 = vpop.f32.mrb[0].mxu0
        %v630 = vadd.f32 0.0, %v629
        %v631 = vpop.f32.mrb[0].mxu0
        %v632 = vpop.f32.mrb[0].mxu0
        %v633 = vpop.f32.mrb[0].mxu0
        %634 = vdwg.mxu0
        %v635 = vadd.f32 %v475, %v630
        %636 = vrot.lane.b32.xlu0 %v309, 112
        %v637 = vpop.permute.xlu0 %636
        %638 = vrot.lane.b32.xlu0 %v309, 80
        %v639 = vpop.permute.xlu0 %638
        %v641 = vsel %vm318, %v637, 0
        %v644 = vsel %vm318, %v639, 0
        %646 = vmatprep.subr.bf16.mxu0 0
        %647 = vmatpush1.bf16.xpose.msra.mxu0 %v644
        %648 = vmatprep.subr.bf16.mxu0 0
        %649 = vmatpush1.bf16.xpose.msra.mxu0 0
        %650 = vmatprep.subr.bf16.mxu0 0
        %651 = vmatpush1.bf16.xpose.msra.mxu0 0
        %652 = vmatprep.subr.bf16.mxu0 0
        %653 = vmatpush1.bf16.xpose.msra.mxu0 0
        %654 = vmatprep.subr.bf16.mxu0 0
        %655 = vmatpush1.bf16.xpose.msra.mxu0 0
        %656 = vmatprep.subr.bf16.mxu0 0
        %657 = vmatpush1.bf16.xpose.msra.mxu0 0
        %658 = vmatprep.subr.bf16.mxu0 0
        %659 = vmatpush1.bf16.xpose.msra.mxu0 0
        %660 = vmatprep.subr.bf16.mxu0 0
        %661 = vmatpush1.bf16.xpose.msra.mxu0 0
        %662 = vmatprep.subr.bf16.mxu0 0
        %663 = vmatpush1.bf16.xpose.msra.mxu0 0
        %664 = vmatprep.subr.bf16.mxu0 0
        %665 = vmatpush1.bf16.xpose.msra.mxu0 0
        %666 = vmatprep.subr.bf16.mxu0 0
        %667 = vmatpush1.bf16.xpose.msra.mxu0 0
        %668 = vmatprep.subr.bf16.mxu0 0
        %669 = vmatpush1.bf16.xpose.msra.mxu0 0
        %670 = vmatprep.subr.bf16.mxu0 0
        %671 = vmatpush1.bf16.xpose.msra.mxu0 0
        %672 = vmatprep.subr.bf16.mxu0 0
        %673 = vmatpush1.bf16.xpose.msra.mxu0 0
        %674 = vmatprep.subr.bf16.mxu0 0
        %675 = vmatpush1.bf16.xpose.msra.mxu0 0
        %676 = vmatprep.subr.bf16.mxu0 0
        %677 = vmatpush1.bf16.xpose.msra.mxu0 0
        %678 = vmatprep.mubr.bf16.mxu0 0
        %679 = vmatmul.mubr.bf16.gmra.mrb[0].mxu0 %v641
        %v680 = vpop.f32.mrb[0].mxu0
        %v681 = vadd.f32 0.0, %v680
        %v682 = vpop.f32.mrb[0].mxu0
        %v683 = vpop.f32.mrb[0].mxu0
        %v684 = vpop.f32.mrb[0].mxu0
        %685 = vdwg.mxu0
        %v686 = vmul.f32 %v681, 0.35355338
        %v687 = vsel %vm318, %v686, -inf
        %688 = vmax.xlane.f32.xlu0 %v687
        %v689 = vpop.xlane.xlu0 %688
        %v690 = vsub.f32 %v686, %v689
        %v691 = vmul.f32 %v690, 1.442695
        %v692 = vpow.pop %v691
        %v693 = vsel %vm318, %v692, 0.0
        %694 = vadd.xlane.f32.xlu0 %v693
        %v695 = vpop.xlane.xlu0 %694
        %v696 = vrcp.pop %v695
        %v697 = vmul.f32 %v692, %v696
        %v698 = vpack.c.bf16 %v697, %v697
        %699 = vrot.lane.b32.xlu0 %v309, 48
        %v700 = vpop.permute.xlu0 %699
        %v702 = vsel %vm318, %v698, 0
        %v705 = vsel %vm383, %v700, 0
        %707 = vmatprep.subr.bf16.mxu0 0
        %708 = vmatpush1.bf16.msra.mxu0 %v705
        %709 = vmatprep.subr.bf16.mxu0 0
        %710 = vmatpush1.bf16.msra.mxu0 0
        %711 = vmatprep.subr.bf16.mxu0 0
        %712 = vmatpush1.bf16.msra.mxu0 0
        %713 = vmatprep.subr.bf16.mxu0 0
        %714 = vmatpush1.bf16.msra.mxu0 0
        %715 = vmatprep.subr.bf16.mxu0 0
        %716 = vmatpush1.bf16.msra.mxu0 0
        %717 = vmatprep.subr.bf16.mxu0 0
        %718 = vmatpush1.bf16.msra.mxu0 0
        %719 = vmatprep.subr.bf16.mxu0 0
        %720 = vmatpush1.bf16.msra.mxu0 0
        %721 = vmatprep.subr.bf16.mxu0 0
        %722 = vmatpush1.bf16.msra.mxu0 0
        %723 = vmatprep.subr.bf16.mxu0 0
        %724 = vmatpush1.bf16.msra.mxu0 0
        %725 = vmatprep.subr.bf16.mxu0 0
        %726 = vmatpush1.bf16.msra.mxu0 0
        %727 = vmatprep.subr.bf16.mxu0 0
        %728 = vmatpush1.bf16.msra.mxu0 0
        %729 = vmatprep.subr.bf16.mxu0 0
        %730 = vmatpush1.bf16.msra.mxu0 0
        %731 = vmatprep.subr.bf16.mxu0 0
        %732 = vmatpush1.bf16.msra.mxu0 0
        %733 = vmatprep.subr.bf16.mxu0 0
        %734 = vmatpush1.bf16.msra.mxu0 0
        %735 = vmatprep.subr.bf16.mxu0 0
        %736 = vmatpush1.bf16.msra.mxu0 0
        %737 = vmatprep.subr.bf16.mxu0 0
        %738 = vmatpush1.bf16.msra.mxu0 0
        %739 = vmatprep.mubr.bf16.mxu0 0
        %740 = vmatmul.mubr.bf16.gmra.mrb[0].mxu0 %v702
        %v741 = vpop.f32.mrb[0].mxu0
        %v742 = vadd.f32 0.0, %v741
        %v743 = vpop.f32.mrb[0].mxu0
        %v744 = vpop.f32.mrb[0].mxu0
        %v745 = vpop.f32.mrb[0].mxu0
        %746 = vdwg.mxu0
        %v747 = vpack.c.bf16 %v742, %v742
        %v748 = vld [vmem:[#allocation7 + $0x8] sm:$0xf]
        %v750 = vsel %vm318, %v747, 0
        %v753 = vsel %vm383, %v748, 0
        %755 = vmatprep.subr.bf16.mxu0 0
        %756 = vmatpush1.bf16.msra.mxu0 %v753
        %757 = vmatprep.subr.bf16.mxu0 0
        %758 = vmatpush1.bf16.msra.mxu0 0
        %759 = vmatprep.subr.bf16.mxu0 0
        %760 = vmatpush1.bf16.msra.mxu0 0
        %761 = vmatprep.subr.bf16.mxu0 0
        %762 = vmatpush1.bf16.msra.mxu0 0
        %763 = vmatprep.subr.bf16.mxu0 0
        %764 = vmatpush1.bf16.msra.mxu0 0
        %765 = vmatprep.subr.bf16.mxu0 0
        %766 = vmatpush1.bf16.msra.mxu0 0
        %767 = vmatprep.subr.bf16.mxu0 0
        %768 = vmatpush1.bf16.msra.mxu0 0
        %769 = vmatprep.subr.bf16.mxu0 0
        %770 = vmatpush1.bf16.msra.mxu0 0
        %771 = vmatprep.subr.bf16.mxu0 0
        %772 = vmatpush1.bf16.msra.mxu0 0
        %773 = vmatprep.subr.bf16.mxu0 0
        %774 = vmatpush1.bf16.msra.mxu0 0
        %775 = vmatprep.subr.bf16.mxu0 0
        %776 = vmatpush1.bf16.msra.mxu0 0
        %777 = vmatprep.subr.bf16.mxu0 0
        %778 = vmatpush1.bf16.msra.mxu0 0
        %779 = vmatprep.subr.bf16.mxu0 0
        %780 = vmatpush1.bf16.msra.mxu0 0
        %781 = vmatprep.subr.bf16.mxu0 0
        %782 = vmatpush1.bf16.msra.mxu0 0
        %783 = vmatprep.subr.bf16.mxu0 0
        %784 = vmatpush1.bf16.msra.mxu0 0
        %785 = vmatprep.subr.bf16.mxu0 0
        %786 = vmatpush1.bf16.msra.mxu0 0
        %787 = vmatprep.mubr.bf16.mxu0 0
        %788 = vmatmul.mubr.bf16.gmra.mrb[0].mxu0 %v750
        %v789 = vpop.f32.mrb[0].mxu0
        %v790 = vadd.f32 0.0, %v789
        %v791 = vpop.f32.mrb[0].mxu0
        %v792 = vpop.f32.mrb[0].mxu0
        %v793 = vpop.f32.mrb[0].mxu0
        %794 = vdwg.mxu0
        %v795 = vadd.f32 %v635, %v790
        %796 = vrot.lane.b32.xlu0 %v309, 104
        %v797 = vpop.permute.xlu0 %796
        %798 = vrot.lane.b32.xlu0 %v309, 72
        %v799 = vpop.permute.xlu0 %798
        %v801 = vsel %vm318, %v797, 0
        %v804 = vsel %vm318, %v799, 0
        %806 = vmatprep.subr.bf16.mxu0 0
        %807 = vmatpush1.bf16.xpose.msra.mxu0 %v804
        %808 = vmatprep.subr.bf16.mxu0 0
        %809 = vmatpush1.bf16.xpose.msra.mxu0 0
        %810 = vmatprep.subr.bf16.mxu0 0
        %811 = vmatpush1.bf16.xpose.msra.mxu0 0
        %812 = vmatprep.subr.bf16.mxu0 0
        %813 = vmatpush1.bf16.xpose.msra.mxu0 0
        %814 = vmatprep.subr.bf16.mxu0 0
        %815 = vmatpush1.bf16.xpose.msra.mxu0 0
        %816 = vmatprep.subr.bf16.mxu0 0
        %817 = vmatpush1.bf16.xpose.msra.mxu0 0
        %818 = vmatprep.subr.bf16.mxu0 0
        %819 = vmatpush1.bf16.xpose.msra.mxu0 0
        %820 = vmatprep.subr.bf16.mxu0 0
        %821 = vmatpush1.bf16.xpose.msra.mxu0 0
        %822 = vmatprep.subr.bf16.mxu0 0
        %823 = vmatpush1.bf16.xpose.msra.mxu0 0
        %824 = vmatprep.subr.bf16.mxu0 0
        %825 = vmatpush1.bf16.xpose.msra.mxu0 0
        %826 = vmatprep.subr.bf16.mxu0 0
        %827 = vmatpush1.bf16.xpose.msra.mxu0 0
        %828 = vmatprep.subr.bf16.mxu0 0
        %829 = vmatpush1.bf16.xpose.msra.mxu0 0
        %830 = vmatprep.subr.bf16.mxu0 0
        %831 = vmatpush1.bf16.xpose.msra.mxu0 0
        %832 = vmatprep.subr.bf16.mxu0 0
        %833 = vmatpush1.bf16.xpose.msra.mxu0 0
        %834 = vmatprep.subr.bf16.mxu0 0
        %835 = vmatpush1.bf16.xpose.msra.mxu0 0
        %836 = vmatprep.subr.bf16.mxu0 0
        %837 = vmatpush1.bf16.xpose.msra.mxu0 0
        %838 = vmatprep.mubr.bf16.mxu0 0
        %839 = vmatmul.mubr.bf16.gmra.mrb[0].mxu0 %v801
        %v840 = vpop.f32.mrb[0].mxu0
        %v841 = vadd.f32 0.0, %v840
        %v842 = vpop.f32.mrb[0].mxu0
        %v843 = vpop.f32.mrb[0].mxu0
        %v844 = vpop.f32.mrb[0].mxu0
        %845 = vdwg.mxu0
        %v846 = vmul.f32 %v841, 0.35355338
        %v847 = vsel %vm318, %v846, -inf
        %848 = vmax.xlane.f32.xlu0 %v847
        %v849 = vpop.xlane.xlu0 %848
        %v850 = vsub.f32 %v846, %v849
        %v851 = vmul.f32 %v850, 1.442695
        %v852 = vpow.pop %v851
        %v853 = vsel %vm318, %v852, 0.0
        %854 = vadd.xlane.f32.xlu0 %v853
        %v855 = vpop.xlane.xlu0 %854
        %v856 = vrcp.pop %v855
        %v857 = vmul.f32 %v852, %v856
        %v858 = vpack.c.bf16 %v857, %v857
        %859 = vrot.lane.b32.xlu0 %v309, 40
        %v860 = vpop.permute.xlu0 %859
        %v862 = vsel %vm318, %v858, 0
        %v865 = vsel %vm383, %v860, 0
        %867 = vmatprep.subr.bf16.mxu0 0
        %868 = vmatpush1.bf16.msra.mxu0 %v865
        %869 = vmatprep.subr.bf16.mxu0 0
        %870 = vmatpush1.bf16.msra.mxu0 0
        %871 = vmatprep.subr.bf16.mxu0 0
        %872 = vmatpush1.bf16.msra.mxu0 0
        %873 = vmatprep.subr.bf16.mxu0 0
        %874 = vmatpush1.bf16.msra.mxu0 0
        %875 = vmatprep.subr.bf16.mxu0 0
        %876 = vmatpush1.bf16.msra.mxu0 0
        %877 = vmatprep.subr.bf16.mxu0 0
        %878 = vmatpush1.bf16.msra.mxu0 0
        %879 = vmatprep.subr.bf16.mxu0 0
        %880 = vmatpush1.bf16.msra.mxu0 0
        %881 = vmatprep.subr.bf16.mxu0 0
        %882 = vmatpush1.bf16.msra.mxu0 0
        %883 = vmatprep.subr.bf16.mxu0 0
        %884 = vmatpush1.bf16.msra.mxu0 0
        %885 = vmatprep.subr.bf16.mxu0 0
        %886 = vmatpush1.bf16.msra.mxu0 0
        %887 = vmatprep.subr.bf16.mxu0 0
        %888 = vmatpush1.bf16.msra.mxu0 0
        %889 = vmatprep.subr.bf16.mxu0 0
        %890 = vmatpush1.bf16.msra.mxu0 0
        %891 = vmatprep.subr.bf16.mxu0 0
        %892 = vmatpush1.bf16.msra.mxu0 0
        %893 = vmatprep.subr.bf16.mxu0 0
        %894 = vmatpush1.bf16.msra.mxu0 0
        %895 = vmatprep.subr.bf16.mxu0 0
        %896 = vmatpush1.bf16.msra.mxu0 0
        %897 = vmatprep.subr.bf16.mxu0 0
        %898 = vmatpush1.bf16.msra.mxu0 0
        %899 = vmatprep.mubr.bf16.mxu0 0
        %900 = vmatmul.mubr.bf16.gmra.mrb[0].mxu0 %v862
        %v901 = vpop.f32.mrb[0].mxu0
        %v902 = vadd.f32 0.0, %v901
        %v903 = vpop.f32.mrb[0].mxu0
        %v904 = vpop.f32.mrb[0].mxu0
        %v905 = vpop.f32.mrb[0].mxu0
        %906 = vdwg.mxu0
        %v907 = vpack.c.bf16 %v902, %v902
        %v908 = vld [vmem:[#allocation7 + $0xc] sm:$0xf]
        %v910 = vsel %vm318, %v907, 0
        %v913 = vsel %vm383, %v908, 0
        %915 = vmatprep.subr.bf16.mxu0 0
        %916 = vmatpush1.bf16.msra.mxu0 %v913
        %917 = vmatprep.subr.bf16.mxu0 0
        %918 = vmatpush1.bf16.msra.mxu0 0
        %919 = vmatprep.subr.bf16.mxu0 0
        %920 = vmatpush1.bf16.msra.mxu0 0
        %921 = vmatprep.subr.bf16.mxu0 0
        %922 = vmatpush1.bf16.msra.mxu0 0
        %923 = vmatprep.subr.bf16.mxu0 0
        %924 = vmatpush1.bf16.msra.mxu0 0
        %925 = vmatprep.subr.bf16.mxu0 0
        %926 = vmatpush1.bf16.msra.mxu0 0
        %927 = vmatprep.subr.bf16.mxu0 0
        %928 = vmatpush1.bf16.msra.mxu0 0
        %929 = vmatprep.subr.bf16.mxu0 0
        %930 = vmatpush1.bf16.msra.mxu0 0
        %931 = vmatprep.subr.bf16.mxu0 0
        %932 = vmatpush1.bf16.msra.mxu0 0
        %933 = vmatprep.subr.bf16.mxu0 0
        %934 = vmatpush1.bf16.msra.mxu0 0
        %935 = vmatprep.subr.bf16.mxu0 0
        %936 = vmatpush1.bf16.msra.mxu0 0
        %937 = vmatprep.subr.bf16.mxu0 0
        %938 = vmatpush1.bf16.msra.mxu0 0
        %939 = vmatprep.subr.bf16.mxu0 0
        %940 = vmatpush1.bf16.msra.mxu0 0
        %941 = vmatprep.subr.bf16.mxu0 0
        %942 = vmatpush1.bf16.msra.mxu0 0
        %943 = vmatprep.subr.bf16.mxu0 0
        %944 = vmatpush1.bf16.msra.mxu0 0
        %945 = vmatprep.subr.bf16.mxu0 0
        %946 = vmatpush1.bf16.msra.mxu0 0
        %947 = vmatprep.mubr.bf16.mxu0 0
        %948 = vmatmul.mubr.bf16.gmra.mrb[0].mxu0 %v910
        %v949 = vpop.f32.mrb[0].mxu0
        %v950 = vadd.f32 0.0, %v949
        %v951 = vpop.f32.mrb[0].mxu0
        %v952 = vpop.f32.mrb[0].mxu0
        %v953 = vpop.f32.mrb[0].mxu0
        %954 = vdwg.mxu0
        %v955 = vadd.f32 %v795, %v950
        %956 = vst.msk [vmem:[%s241] sm:$0xff] %vm265, %v955
        %s957 = sand.u32 %s119, 1
        %s958 = scalar_lea.sflag [#allocation4], %s957
        %s959 = sand.u32 %s119, 1
        %s960 = smul.addr %s959, 8
        %s961 = scalar_lea.vmem [#allocation8], %s960
        // Predicated region
        $region49: #{tpu_custom_call.1} parent=35 // pred_check
          %p962 = pneg %p129
        $region50: #{tpu_custom_call.1} parent=35 // pred_check_branch
          %964 = sbr.rel (%p962) target = $region52
        $region51: #{tpu_custom_call.1} parent=35 // pred_region
          %s966 = ssub.s32 128, 128
          %967 = vsyncadd %s958, %s966
          %s968 = smul.addr %s22, 128
          %s969 = scalar_lea.hbm %s4, %s968
          %s971 = sshll.u32 %s961, 4
          %s972 = int_to_ptr.vmem [resolvable:$true] %s971
          %974 = dma.vmem_to_hbm [thread:$0]  %s972, 128, %s969, %s958
        $region52: #{tpu_custom_call.1} parent=35 // pred_fallthru
          _
      $region36: #{tpu_custom_call.1} parent=5 // pred_fallthru
        _
      %p975 = scmp.le.s32.totalorder 2, %s17
      // Predicated region
      $region53: #{tpu_custom_call.1} parent=5 // pred_check
        %p976 = pneg %p975
      $region54: #{tpu_custom_call.1} parent=5 // pred_check_branch
        %978 = sbr.rel (%p976) target = $region56
      $region55: #{tpu_custom_call.1} parent=5 // pred_region
        %s979 = ssub.s32 %s17, 2
        // Predicated region
        $region57: #{tpu_custom_call.1} parent=55 // pred_check
          %p980 = pneg %p135
        $region58: #{tpu_custom_call.1} parent=55 // pred_check_branch
          %982 = sbr.rel (%p980) target = $region60
        $region59: #{tpu_custom_call.1} parent=55 // pred_region
          %s983 = sand.u32 %s120, 1
          %s984 = scalar_lea.sflag [#allocation4], %s983
          %s985 = sand.u32 %s120, 1
          %s986 = smul.addr %s985, 8
          %s987 = scalar_lea.vmem [#allocation8], %s986
          %988 = dma.done %s984, 128
        $region60: #{tpu_custom_call.1} parent=55 // pred_fallthru
          _
      $region56: #{tpu_custom_call.1} parent=5 // pred_fallthru
        _
    $region6: #{tpu_custom_call.1} parent=1 // loop_footer
      %s21 = sadd.s32 1, %s17
    $region7: #{tpu_custom_call.1} parent=1 // loop_footer_branch
      %16 = sbr.rel target = $region3
    $region8: #{tpu_custom_call.1} parent=1 // loop_exit
      _
    %989 = vsyncpa [#allocation3], 1
    %s990 = scalar_lea.sflag [#allocation3], 1
    %991 = vsyncpa %s990, 1
    %992 = vsyncpa [#allocation6], 1
    %993 = vsyncpa [#allocation4], 1
    %s994 = scalar_lea.sflag [#allocation4], 1
    %995 = vsyncpa %s994, 1

</llo_original>
